<compile_context>
chip_gen: v5e
topology: v5e:2x2
jax: 0.10.0
libtpu: 0.0.40
codegen_flags: <defaults>
</compile_context>

<pallas_src>
import jax
import jax.numpy as jnp
import numpy as np
from jax import lax
from jax.experimental import pallas as pl
from jax.experimental.pallas import tpu as pltpu

_EPS = 1e-4


def _round_up(x, m):
    return (x + m - 1) // m * m


def _pick_batch_tile(b, hp, wp, budget_bytes=2 << 20, max_bt=16):
    """Largest divisor of b with block <= ~budget bytes and <= max_bt images."""
    per_img = hp * wp * 4
    cap = max(1, min(max_bt, budget_bytes // per_img))
    bt = 1
    for d in range(1, min(b, cap) + 1):
        if b % d == 0:
            bt = d
    return bt


def _make_kernels(h, w, hp, wp, bt):
    pad_h = hp != h   # True -> zero rows exist after row h-1 (roll wrap lands in zeros)
    pad_w = wp != w
    padded = pad_h or pad_w

    def _abs_laplacian(x):
        """|3x3 Laplacian| of one (hp, wp) image tile, reproducing conv2d zero padding."""
        up    = pltpu.roll(x, 1,      axis=0)   # x[i-1, j]
        down  = pltpu.roll(x, hp - 1, axis=0)   # x[i+1, j]
        left  = pltpu.roll(x, 1,      axis=1)   # x[i, j-1]
        right = pltpu.roll(x, wp - 1, axis=1)   # x[i, j+1]
        if not pad_h:   # no zero-pad rows -> explicitly zero the wrap row
            r = lax.broadcasted_iota(jnp.int32, (hp, wp), 0)
            up   = jnp.where(r == 0,      0.0, up)
            down = jnp.where(r == hp - 1, 0.0, down)
        if not pad_w:   # no zero-pad cols -> explicitly zero the wrap col
            c = lax.broadcasted_iota(jnp.int32, (hp, wp), 1)
            left  = jnp.where(c == 0,      0.0, left)
            right = jnp.where(c == wp - 1, 0.0, right)
        return jnp.abs(up + down + left + right - 4.0 * x)

    def _valid_mask():
        r = lax.broadcasted_iota(jnp.int32, (hp, wp), 0)
        c = lax.broadcasted_iota(jnp.int32, (hp, wp), 1)
        return (r < h) & (c < w)

    # ---- Pass 1: per-block partial (min, max) of |laplacian| -------------------
    def minmax_kernel(x_ref, min_ref, max_ref):
        # x_ref: (bt, hp, wp) VMEM; min_ref / max_ref: (1, 8, 128) VMEM partials.
        run_min = jnp.full((hp, wp), jnp.inf, jnp.float32)
        run_max = jnp.full((hp, wp), -jnp.inf, jnp.float32)
        for b in range(bt):                       # static unroll over images in block
            g = _abs_laplacian(x_ref[b])
            run_min = jnp.minimum(run_min, g)
            run_max = jnp.maximum(run_max, g)
        if padded:                                # keep padded cells out of min/max
            valid = _valid_mask()
            run_min = jnp.where(valid, run_min, jnp.inf)
            run_max = jnp.where(valid, run_max, -jnp.inf)
        min_ref[...] = jnp.full(min_ref.shape, jnp.min(run_min), jnp.float32)
        max_ref[...] = jnp.full(max_ref.shape, jnp.max(run_max), jnp.float32)

    # ---- Pass 2: recompute |laplacian|, normalize, store valid region only -----
    def normalize_kernel(scal_ref, x_ref, o_ref):
        # scal_ref: (2,) SMEM [g_min, 1/(g_max - g_min + eps)]
        # x_ref: (bt, hp, wp) VMEM; o_ref: (bt, h, w) VMEM (unpadded output)
        g_min = scal_ref[0]
        inv   = scal_ref[1]
        for b in range(bt):
            g = _abs_laplacian(x_ref[b])
            o_ref[b] = ((g - g_min) * inv)[:h, :w]   # slice is a no-op when aligned

    return minmax_kernel, normalize_kernel


@jax.jit
def laplacian_layer(x_nchw):
    """x_nchw: (N, 1, H, W) float -> (N, 1, H, W) float32."""
    n, c, h, w = x_nchw.shape
    if c != 1:
        raise ValueError(
            "LaplacianLayer conv weight is (1,1,3,3): input must have 1 channel")
    b = n * c
    x = x_nchw.reshape(b, h, w).astype(jnp.float32)

    hp = _round_up(h, 8)
    wp = _round_up(w, 128)
    if (hp, wp) != (h, w):          # pad only when unaligned (skip the HBM round trip otherwise)
        x = jnp.pad(x, ((0, 0), (0, hp - h), (0, wp - w)))

    bt = _pick_batch_tile(b, hp, wp)
    grid = (b // bt,)
    minmax_kernel, normalize_kernel = _make_kernels(h, w, hp, wp, bt)

    img_spec  = pl.BlockSpec((bt, hp, wp), lambda i: (i, 0, 0))
    part_spec = pl.BlockSpec((1, 8, 128), lambda i: (i, 0, 0))
    smem_spec = pl.BlockSpec(memory_space=pltpu.MemorySpace.SMEM)

    # Pass 1: partial min/max per block ('parallel' -> both TCs on v7x; harmless elsewhere).
    mins, maxs = pl.pallas_call(
        minmax_kernel,
        grid=grid,
        in_specs=[img_spec],
        out_specs=(part_spec, part_spec),
        out_shape=(jax.ShapeDtypeStruct((grid[0], 8, 128), jnp.float32),
                   jax.ShapeDtypeStruct((grid[0], 8, 128), jnp.float32)),
        compiler_params=pltpu.CompilerParams(
            dimension_semantics=("parallel",)),
    )(x)

    # Tiny JAX reduction of the partials + hoisted reciprocal (scalar work only).
    g_min = jnp.min(mins)
    g_max = jnp.max(maxs)
    scalars = jnp.stack([g_min, 1.0 / (g_max - g_min + _EPS)]).astype(jnp.float32)

    # Pass 2: normalize; output is the unpadded (B, H, W) array -> no wrapper slice.
    out_spec = pl.BlockSpec((bt, h, w), lambda i: (i, 0, 0))
    out = pl.pallas_call(
        normalize_kernel,
        grid=grid,
        in_specs=[smem_spec, img_spec],
        out_specs=out_spec,
        out_shape=jax.ShapeDtypeStruct((b, h, w), jnp.float32),
        compiler_params=pltpu.CompilerParams(
            dimension_semantics=("parallel",)),
    )(scalars, x)

    return out.reshape(n, c, h, w)


def _reference(x_nchw):
    """Pure-JAX reference for a sanity check."""
    n, c, h, w = x_nchw.shape
    x = x_nchw.reshape(n * c, h, w).astype(jnp.float32)
    p = jnp.pad(x, ((0, 0), (1, 1), (1, 1)))
    lap = (p[:, 0:h, 1:w + 1] + p[:, 2:h + 2, 1:w + 1]
           + p[:, 1:h + 1, 0:w] + p[:, 1:h + 1, 2:w + 2] - 4.0 * x)
    g = jnp.abs(lap)
    g_min, g_max = jnp.min(g), jnp.max(g)
    return ((g - g_min) / (g_max - g_min + _EPS)).reshape(n, c, h, w)


if __name__ == "__main__":
    key = jax.random.PRNGKey(0)
    test_shapes = [
        (2, 1, 16, 16),    # spec-sized, W unaligned -> padded path + folded slice
        (4, 1, 16, 256),   # already (8,128)-aligned -> no pad, no slice, wrap masks
        (2, 1, 13, 40),    # both dims unaligned
        (32, 1, 16, 16),   # multi-block grid (Bt=16 images/block, 2 grid steps)
    ]
    for i, shape in enumerate(test_shapes):
        x = jax.random.normal(jax.random.fold_in(key, i), shape, dtype=jnp.float32)
        out = jax.block_until_ready(laplacian_layer(x))
        ref = _reference(x)
        np.testing.assert_allclose(np.asarray(out), np.asarray(ref),
                                   rtol=1e-5, atol=1e-6)
    print("KERNEL_OK")
</pallas_src>

<mosaic_0001>
module attributes {stable_mosaic.version = 11 : i64} {
  func.func @minmax_kernel(%arg0: i32, %arg1: memref<2x16x128xf32, #tpu.memory_space<vmem>>, %arg2: memref<1x8x128xf32, #tpu.memory_space<vmem>>, %arg3: memref<1x8x128xf32, #tpu.memory_space<vmem>>) attributes {dimension_semantics = [#tpu.dimension_semantics<parallel>], iteration_bounds = array<i64: 1>, scalar_prefetch = 0 : i64, scratch_operands = 0 : i64, tpu.core_type = #tpu.core_type<tc>, window_params = [{transform_indices = @transform_0, window_bounds = array<i64: 2, 16, 128>}, {transform_indices = @transform_1, window_bounds = array<i64: 1, 8, 128>}, {transform_indices = @transform_2, window_bounds = array<i64: 1, 8, 128>}]} {
    %cst = arith.constant 0x7F800000 : f32
    %0 = vector.broadcast %cst : f32 to vector<16x128xf32>
    %cst_0 = arith.constant 0xFF800000 : f32
    %1 = vector.broadcast %cst_0 : f32 to vector<16x128xf32>
    %c0 = arith.constant 0 : index
    %c0_1 = arith.constant 0 : index
    %c0_2 = arith.constant 0 : index
    %2 = vector.load %arg1[%c0, %c0_1, %c0_2] : memref<2x16x128xf32, #tpu.memory_space<vmem>>, vector<1x16x128xf32>
    %3 = vector.shape_cast %2 : vector<1x16x128xf32> to vector<16x128xf32>
    %c1_i32 = arith.constant 1 : i32
    %4 = tpu.dynamic_rotate %3 by %c1_i32 dim 0 : vector<16x128xf32>, i32 -> vector<16x128xf32>
    %c15_i32 = arith.constant 15 : i32
    %5 = tpu.dynamic_rotate %3 by %c15_i32 dim 0 : vector<16x128xf32>, i32 -> vector<16x128xf32>
    %c1_i32_3 = arith.constant 1 : i32
    %6 = tpu.dynamic_rotate %3 by %c1_i32_3 dim 1 : vector<16x128xf32>, i32 -> vector<16x128xf32>
    %c127_i32 = arith.constant 127 : i32
    %7 = tpu.dynamic_rotate %3 by %c127_i32 dim 1 : vector<16x128xf32>, i32 -> vector<16x128xf32>
    %8 = tpu.iota {dimensions = array<i32: 0>} : vector<16x128xi32>
    %c0_i32 = arith.constant 0 : i32
    %9 = vector.broadcast %c0_i32 : i32 to vector<16x128xi32>
    %10 = arith.cmpi eq, %8, %9 : vector<16x128xi32>
    %cst_4 = arith.constant 0.000000e+00 : f32
    %11 = vector.broadcast %cst_4 : f32 to vector<16x128xf32>
    %12 = arith.select %10, %11, %4 : vector<16x128xi1>, vector<16x128xf32>
    %c15_i32_5 = arith.constant 15 : i32
    %13 = vector.broadcast %c15_i32_5 : i32 to vector<16x128xi32>
    %14 = arith.cmpi eq, %8, %13 : vector<16x128xi32>
    %cst_6 = arith.constant 0.000000e+00 : f32
    %15 = vector.broadcast %cst_6 : f32 to vector<16x128xf32>
    %16 = arith.select %14, %15, %5 : vector<16x128xi1>, vector<16x128xf32>
    %17 = arith.addf %12, %16 : vector<16x128xf32>
    %18 = arith.addf %17, %6 : vector<16x128xf32>
    %19 = arith.addf %18, %7 : vector<16x128xf32>
    %cst_7 = arith.constant 4.000000e+00 : f32
    %20 = vector.broadcast %cst_7 : f32 to vector<16x128xf32>
    %21 = arith.mulf %20, %3 : vector<16x128xf32>
    %22 = arith.subf %19, %21 : vector<16x128xf32>
    %23 = math.absf %22 : vector<16x128xf32>
    %24 = arith.minimumf %0, %23 : vector<16x128xf32>
    %25 = arith.maximumf %1, %23 : vector<16x128xf32>
    %c1 = arith.constant 1 : index
    %c0_8 = arith.constant 0 : index
    %c0_9 = arith.constant 0 : index
    %26 = vector.load %arg1[%c1, %c0_8, %c0_9] : memref<2x16x128xf32, #tpu.memory_space<vmem>>, vector<1x16x128xf32>
    %27 = vector.shape_cast %26 : vector<1x16x128xf32> to vector<16x128xf32>
    %c1_i32_10 = arith.constant 1 : i32
    %28 = tpu.dynamic_rotate %27 by %c1_i32_10 dim 0 : vector<16x128xf32>, i32 -> vector<16x128xf32>
    %c15_i32_11 = arith.constant 15 : i32
    %29 = tpu.dynamic_rotate %27 by %c15_i32_11 dim 0 : vector<16x128xf32>, i32 -> vector<16x128xf32>
    %c1_i32_12 = arith.constant 1 : i32
    %30 = tpu.dynamic_rotate %27 by %c1_i32_12 dim 1 : vector<16x128xf32>, i32 -> vector<16x128xf32>
    %c127_i32_13 = arith.constant 127 : i32
    %31 = tpu.dynamic_rotate %27 by %c127_i32_13 dim 1 : vector<16x128xf32>, i32 -> vector<16x128xf32>
    %32 = tpu.iota {dimensions = array<i32: 0>} : vector<16x128xi32>
    %c0_i32_14 = arith.constant 0 : i32
    %33 = vector.broadcast %c0_i32_14 : i32 to vector<16x128xi32>
    %34 = arith.cmpi eq, %32, %33 : vector<16x128xi32>
    %cst_15 = arith.constant 0.000000e+00 : f32
    %35 = vector.broadcast %cst_15 : f32 to vector<16x128xf32>
    %36 = arith.select %34, %35, %28 : vector<16x128xi1>, vector<16x128xf32>
    %c15_i32_16 = arith.constant 15 : i32
    %37 = vector.broadcast %c15_i32_16 : i32 to vector<16x128xi32>
    %38 = arith.cmpi eq, %32, %37 : vector<16x128xi32>
    %cst_17 = arith.constant 0.000000e+00 : f32
    %39 = vector.broadcast %cst_17 : f32 to vector<16x128xf32>
    %40 = arith.select %38, %39, %29 : vector<16x128xi1>, vector<16x128xf32>
    %41 = arith.addf %36, %40 : vector<16x128xf32>
    %42 = arith.addf %41, %30 : vector<16x128xf32>
    %43 = arith.addf %42, %31 : vector<16x128xf32>
    %cst_18 = arith.constant 4.000000e+00 : f32
    %44 = vector.broadcast %cst_18 : f32 to vector<16x128xf32>
    %45 = arith.mulf %44, %27 : vector<16x128xf32>
    %46 = arith.subf %43, %45 : vector<16x128xf32>
    %47 = math.absf %46 : vector<16x128xf32>
    %48 = arith.minimumf %24, %47 : vector<16x128xf32>
    %49 = arith.maximumf %25, %47 : vector<16x128xf32>
    %50 = tpu.iota {dimensions = array<i32: 0>} : vector<16x128xi32>
    %51 = tpu.iota {dimensions = array<i32: 1>} : vector<16x128xi32>
    %c16_i32 = arith.constant 16 : i32
    %52 = vector.broadcast %c16_i32 : i32 to vector<16x128xi32>
    %53 = arith.cmpi slt, %50, %52 : vector<16x128xi32>
    %c16_i32_19 = arith.constant 16 : i32
    %54 = vector.broadcast %c16_i32_19 : i32 to vector<16x128xi32>
    %55 = arith.cmpi slt, %51, %54 : vector<16x128xi32>
    %56 = arith.andi %53, %55 : vector<16x128xi1>
    %cst_20 = arith.constant 0x7F800000 : f32
    %57 = vector.broadcast %cst_20 : f32 to vector<16x128xf32>
    %58 = arith.select %56, %48, %57 : vector<16x128xi1>, vector<16x128xf32>
    %cst_21 = arith.constant 0xFF800000 : f32
    %59 = vector.broadcast %cst_21 : f32 to vector<16x128xf32>
    %60 = arith.select %56, %49, %59 : vector<16x128xi1>, vector<16x128xf32>
    %61 = vector.shape_cast %58 : vector<16x128xf32> to vector<1x16x128xf32>
    %cst_22 = arith.constant dense<0x7F800000> : vector<1xf32>
    %62 = vector.multi_reduction <minimumf>, %61, %cst_22 [1, 2] : vector<1x16x128xf32> to vector<1xf32>
    %63 = vector.shape_cast %62 : vector<1xf32> to vector<1x1x1xf32>
    %64 = vector.extract %63[0, 0, 0] : f32 from vector<1x1x1xf32>
    %65 = vector.broadcast %64 : f32 to vector<1x8x128xf32>
    %c0_23 = arith.constant 0 : index
    %c0_24 = arith.constant 0 : index
    %c0_25 = arith.constant 0 : index
    %66 = vector.load %arg2[%c0_23, %c0_24, %c0_25] : memref<1x8x128xf32, #tpu.memory_space<vmem>>, vector<1x8x128xf32>
    tpu.vector_store %arg2[%c0_23, %c0_24, %c0_25], %65 {strides = array<i32>} : memref<1x8x128xf32, #tpu.memory_space<vmem>>, vector<1x8x128xf32>,
    %67 = vector.shape_cast %60 : vector<16x128xf32> to vector<1x16x128xf32>
    %cst_26 = arith.constant dense<0xFF800000> : vector<1xf32>
    %68 = vector.multi_reduction <maximumf>, %67, %cst_26 [1, 2] : vector<1x16x128xf32> to vector<1xf32>
    %69 = vector.shape_cast %68 : vector<1xf32> to vector<1x1x1xf32>
    %70 = vector.extract %69[0, 0, 0] : f32 from vector<1x1x1xf32>
    %71 = vector.broadcast %70 : f32 to vector<1x8x128xf32>
    %c0_27 = arith.constant 0 : index
    %c0_28 = arith.constant 0 : index
    %c0_29 = arith.constant 0 : index
    %72 = vector.load %arg3[%c0_27, %c0_28, %c0_29] : memref<1x8x128xf32, #tpu.memory_space<vmem>>, vector<1x8x128xf32>
    tpu.vector_store %arg3[%c0_27, %c0_28, %c0_29], %71 {strides = array<i32>} : memref<1x8x128xf32, #tpu.memory_space<vmem>>, vector<1x8x128xf32>,
    return
  }
  func.func @transform_0(%arg0: i32) -> (i32, i32, i32) {
    %c0_i32 = arith.constant 0 : i32
    %c0_i32_0 = arith.constant 0 : i32
    %c0_i32_1 = arith.constant 0 : i32
    return %arg0, %c0_i32, %c0_i32_0 : i32, i32, i32
  }
  func.func @transform_1(%arg0: i32) -> (i32, i32, i32) {
    %c0_i32 = arith.constant 0 : i32
    %c0_i32_0 = arith.constant 0 : i32
    %c0_i32_1 = arith.constant 0 : i32
    return %arg0, %c0_i32, %c0_i32_0 : i32, i32, i32
  }
  func.func @transform_2(%arg0: i32) -> (i32, i32, i32) {
    %c0_i32 = arith.constant 0 : i32
    %c0_i32_0 = arith.constant 0 : i32
    %c0_i32_1 = arith.constant 0 : i32
    return %arg0, %c0_i32, %c0_i32_0 : i32, i32, i32
  }
}

module attributes {stable_mosaic.version = 11 : i64} {
  func.func @normalize_kernel(%arg0: i32, %arg1: memref<2xf32, #tpu.memory_space<smem>>, %arg2: memref<2x16x128xf32, #tpu.memory_space<vmem>>, %arg3: memref<2x16x16xf32, #tpu.memory_space<vmem>>) attributes {dimension_semantics = [#tpu.dimension_semantics<parallel>], iteration_bounds = array<i64: 1>, scalar_prefetch = 0 : i64, scratch_operands = 0 : i64, tpu.core_type = #tpu.core_type<tc>, window_params = [{transform_indices = @transform_0, window_bounds = array<i64: 2>}, {transform_indices = @transform_1, window_bounds = array<i64: 2, 16, 128>}, {transform_indices = @transform_2, window_bounds = array<i64: 2, 16, 16>}]} {
    %c0 = arith.constant 0 : index
    %0 = memref.load %arg1[%c0] : memref<2xf32, #tpu.memory_space<smem>>
    %c1 = arith.constant 1 : index
    %1 = memref.load %arg1[%c1] : memref<2xf32, #tpu.memory_space<smem>>
    %c0_0 = arith.constant 0 : index
    %c0_1 = arith.constant 0 : index
    %c0_2 = arith.constant 0 : index
    %2 = vector.load %arg2[%c0_0, %c0_1, %c0_2] : memref<2x16x128xf32, #tpu.memory_space<vmem>>, vector<1x16x128xf32>
    %3 = vector.shape_cast %2 : vector<1x16x128xf32> to vector<16x128xf32>
    %c1_i32 = arith.constant 1 : i32
    %4 = tpu.dynamic_rotate %3 by %c1_i32 dim 0 : vector<16x128xf32>, i32 -> vector<16x128xf32>
    %c15_i32 = arith.constant 15 : i32
    %5 = tpu.dynamic_rotate %3 by %c15_i32 dim 0 : vector<16x128xf32>, i32 -> vector<16x128xf32>
    %c1_i32_3 = arith.constant 1 : i32
    %6 = tpu.dynamic_rotate %3 by %c1_i32_3 dim 1 : vector<16x128xf32>, i32 -> vector<16x128xf32>
    %c127_i32 = arith.constant 127 : i32
    %7 = tpu.dynamic_rotate %3 by %c127_i32 dim 1 : vector<16x128xf32>, i32 -> vector<16x128xf32>
    %8 = tpu.iota {dimensions = array<i32: 0>} : vector<16x128xi32>
    %c0_i32 = arith.constant 0 : i32
    %9 = vector.broadcast %c0_i32 : i32 to vector<16x128xi32>
    %10 = arith.cmpi eq, %8, %9 : vector<16x128xi32>
    %cst = arith.constant 0.000000e+00 : f32
    %11 = vector.broadcast %cst : f32 to vector<16x128xf32>
    %12 = arith.select %10, %11, %4 : vector<16x128xi1>, vector<16x128xf32>
    %c15_i32_4 = arith.constant 15 : i32
    %13 = vector.broadcast %c15_i32_4 : i32 to vector<16x128xi32>
    %14 = arith.cmpi eq, %8, %13 : vector<16x128xi32>
    %cst_5 = arith.constant 0.000000e+00 : f32
    %15 = vector.broadcast %cst_5 : f32 to vector<16x128xf32>
    %16 = arith.select %14, %15, %5 : vector<16x128xi1>, vector<16x128xf32>
    %17 = arith.addf %12, %16 : vector<16x128xf32>
    %18 = arith.addf %17, %6 : vector<16x128xf32>
    %19 = arith.addf %18, %7 : vector<16x128xf32>
    %cst_6 = arith.constant 4.000000e+00 : f32
    %20 = vector.broadcast %cst_6 : f32 to vector<16x128xf32>
    %21 = arith.mulf %20, %3 : vector<16x128xf32>
    %22 = arith.subf %19, %21 : vector<16x128xf32>
    %23 = math.absf %22 : vector<16x128xf32>
    %24 = vector.broadcast %0 : f32 to vector<16x128xf32>
    %25 = arith.subf %23, %24 : vector<16x128xf32>
    %26 = vector.broadcast %1 : f32 to vector<16x128xf32>
    %27 = arith.mulf %25, %26 : vector<16x128xf32>
    %28 = vector.extract_strided_slice %27 {offsets = [0, 0], sizes = [16, 16], strides = [1, 1]} : vector<16x128xf32> to vector<16x16xf32>
    %c0_7 = arith.constant 0 : index
    %c0_8 = arith.constant 0 : index
    %c0_9 = arith.constant 0 : index
    %29 = vector.load %arg3[%c0_7, %c0_8, %c0_9] : memref<2x16x16xf32, #tpu.memory_space<vmem>>, vector<1x16x16xf32>
    %30 = vector.shape_cast %29 : vector<1x16x16xf32> to vector<16x16xf32>
    %31 = vector.shape_cast %28 : vector<16x16xf32> to vector<1x16x16xf32>
    tpu.vector_store %arg3[%c0_7, %c0_8, %c0_9], %31 {strides = array<i32>} : memref<2x16x16xf32, #tpu.memory_space<vmem>>, vector<1x16x16xf32>,
    %c1_10 = arith.constant 1 : index
    %c0_11 = arith.constant 0 : index
    %c0_12 = arith.constant 0 : index
    %32 = vector.load %arg2[%c1_10, %c0_11, %c0_12] : memref<2x16x128xf32, #tpu.memory_space<vmem>>, vector<1x16x128xf32>
    %33 = vector.shape_cast %32 : vector<1x16x128xf32> to vector<16x128xf32>
    %c1_i32_13 = arith.constant 1 : i32
    %34 = tpu.dynamic_rotate %33 by %c1_i32_13 dim 0 : vector<16x128xf32>, i32 -> vector<16x128xf32>
    %c15_i32_14 = arith.constant 15 : i32
    %35 = tpu.dynamic_rotate %33 by %c15_i32_14 dim 0 : vector<16x128xf32>, i32 -> vector<16x128xf32>
    %c1_i32_15 = arith.constant 1 : i32
    %36 = tpu.dynamic_rotate %33 by %c1_i32_15 dim 1 : vector<16x128xf32>, i32 -> vector<16x128xf32>
    %c127_i32_16 = arith.constant 127 : i32
    %37 = tpu.dynamic_rotate %33 by %c127_i32_16 dim 1 : vector<16x128xf32>, i32 -> vector<16x128xf32>
    %38 = tpu.iota {dimensions = array<i32: 0>} : vector<16x128xi32>
    %c0_i32_17 = arith.constant 0 : i32
    %39 = vector.broadcast %c0_i32_17 : i32 to vector<16x128xi32>
    %40 = arith.cmpi eq, %38, %39 : vector<16x128xi32>
    %cst_18 = arith.constant 0.000000e+00 : f32
    %41 = vector.broadcast %cst_18 : f32 to vector<16x128xf32>
    %42 = arith.select %40, %41, %34 : vector<16x128xi1>, vector<16x128xf32>
    %c15_i32_19 = arith.constant 15 : i32
    %43 = vector.broadcast %c15_i32_19 : i32 to vector<16x128xi32>
    %44 = arith.cmpi eq, %38, %43 : vector<16x128xi32>
    %cst_20 = arith.constant 0.000000e+00 : f32
    %45 = vector.broadcast %cst_20 : f32 to vector<16x128xf32>
    %46 = arith.select %44, %45, %35 : vector<16x128xi1>, vector<16x128xf32>
    %47 = arith.addf %42, %46 : vector<16x128xf32>
    %48 = arith.addf %47, %36 : vector<16x128xf32>
    %49 = arith.addf %48, %37 : vector<16x128xf32>
    %cst_21 = arith.constant 4.000000e+00 : f32
    %50 = vector.broadcast %cst_21 : f32 to vector<16x128xf32>
    %51 = arith.mulf %50, %33 : vector<16x128xf32>
    %52 = arith.subf %49, %51 : vector<16x128xf32>
    %53 = math.absf %52 : vector<16x128xf32>
    %54 = vector.broadcast %0 : f32 to vector<16x128xf32>
    %55 = arith.subf %53, %54 : vector<16x128xf32>
    %56 = vector.broadcast %1 : f32 to vector<16x128xf32>
    %57 = arith.mulf %55, %56 : vector<16x128xf32>
    %58 = vector.extract_strided_slice %57 {offsets = [0, 0], sizes = [16, 16], strides = [1, 1]} : vector<16x128xf32> to vector<16x16xf32>
    %c1_22 = arith.constant 1 : index
    %c0_23 = arith.constant 0 : index
    %c0_24 = arith.constant 0 : index
    %59 = vector.load %arg3[%c1_22, %c0_23, %c0_24] : memref<2x16x16xf32, #tpu.memory_space<vmem>>, vector<1x16x16xf32>
    %60 = vector.shape_cast %59 : vector<1x16x16xf32> to vector<16x16xf32>
    %61 = vector.shape_cast %58 : vector<16x16xf32> to vector<1x16x16xf32>
    tpu.vector_store %arg3[%c1_22, %c0_23, %c0_24], %61 {strides = array<i32>} : memref<2x16x16xf32, #tpu.memory_space<vmem>>, vector<1x16x16xf32>,
    return
  }
  func.func @transform_0(%arg0: i32) -> i32 {
    %c0_i32 = arith.constant 0 : i32
    %c0_i32_0 = arith.constant 0 : i32
    return %c0_i32 : i32
  }
  func.func @transform_1(%arg0: i32) -> (i32, i32, i32) {
    %c0_i32 = arith.constant 0 : i32
    %c0_i32_0 = arith.constant 0 : i32
    %c0_i32_1 = arith.constant 0 : i32
    return %arg0, %c0_i32, %c0_i32_0 : i32, i32, i32
  }
  func.func @transform_2(%arg0: i32) -> (i32, i32, i32) {
    %c0_i32 = arith.constant 0 : i32
    %c0_i32_0 = arith.constant 0 : i32
    %c0_i32_1 = arith.constant 0 : i32
    return %arg0, %c0_i32, %c0_i32_0 : i32, i32, i32
  }
}

</mosaic_0001>

<llo_original>
// kernel: laplacian_layer.3
$region0: #{laplacian_layer.3}
  #allocation0 [shape = 'u32[]', space=smem, size = 0x4, offset = 0x4, fixed_abs, tag = 'smem constant byte address 0x4 - core index']
  #allocation1 [shape = 'u32[72,128]{1,0:T(1,128)}', space=vmem, size = 0x9000, scoped, tag = 'internal scratch']
  %s0 = inlined_call_operand.vmem [shape: f32[2], index: 0, kind: input, shape index: {}]
  %s1 = inlined_call_operand.vmem [shape: f32[2,16,128], index: 1, kind: input, shape index: {}]
  %s2 = inlined_call_operand.hbm [shape: f32[2,16,16], index: 2, kind: output, shape index: {}]
  %s3 = sld [smem:[#allocation0]]
  $region22: #{laplacian_layer.3} parent=0
    _
  %s5 = ssub.s32 1, %s3
  %s6 = scalar_select 0, %s5, %s3
  $region1: #{laplacian_layer.3} parent=0
    #allocation2 [shape = 'u8[512]{0}', space=smem, size = 0x200, scoped, tag = 'input window, operand 0, single buffered']
    #allocation3 [shape = 's32[1]{0}', space=sflag, size = 0x4, scoped, tag = 'scoped memory for laplacian_layer.3']
    #allocation4 [shape = 's32[1]{0}', space=sflag, size = 0x4, scoped, tag = 'scoped memory for laplacian_layer.3']
    #allocation5 [shape = 'u8[16384]{0}', space=vmem, size = 0x4000, scoped, tag = 'output window, operand 0, single buffered']
    %7 = vsyncpa [#allocation4], 0
    %8 = vsyncpa [#allocation3], 0
    // Predicated region
    $region2: #{laplacian_layer.3} parent=1 // pred_check
      _
    $region3: #{laplacian_layer.3} parent=1 // pred_check_branch
      %10 = sbr.rel (0) target = $region5
    $region4: #{laplacian_layer.3} parent=1 // pred_region
      %12 = vsyncadd [#allocation4], 0
      %s14 = sshll.u32 %s0, 4
      %s15 = int_to_ptr.vmem [resolvable:$true] %s14
      %17 = dma.vmem_to_smem %s15, 16, [#allocation2], [#allocation4]
    $region5: #{laplacian_layer.3} parent=1 // pred_fallthru
      _
    // Predicated region
    $region6: #{laplacian_layer.3} parent=1 // pred_check
      _
    $region7: #{laplacian_layer.3} parent=1 // pred_check_branch
      %19 = sbr.rel (0) target = $region9
    $region8: #{laplacian_layer.3} parent=1 // pred_region
      _
    $region9: #{laplacian_layer.3} parent=1 // pred_fallthru
      _
    // Predicated region
    $region10: #{laplacian_layer.3} parent=1 // pred_check
      _
    $region11: #{laplacian_layer.3} parent=1 // pred_check_branch
      %21 = sbr.rel (0) target = $region13
    $region12: #{laplacian_layer.3} parent=1 // pred_region
      %23 = dma.done [#allocation4], 16
    $region13: #{laplacian_layer.3} parent=1 // pred_fallthru
      _
    %24 = sfence
    %s25 = sld [smem:[#allocation2]]
    %s26 = sld [smem:[#allocation2 + $0x1]]
    %v27 = vld [vmem:[%s1] sm:$0xff]
    %v28 = vld [vmem:[%s1 + $0x8] sm:$0xff]
    %v29 = vrot.slane %v27, 7
    %v30 = vrot.slane %v28, 7
    %v31 = vlaneseq
    %v32 = vshrl.u32 %v31, 7
    %vm33 = vcmp.lt.s32.totalorder %v32, 1
    %v34 = vsel %vm33, %v29, %v30
    %v35 = vsel %vm33, %v30, %v29
    %v36 = vrot.slane %v27, 1
    %v37 = vrot.slane %v28, 1
    %vm38 = vcmp.lt.s32.totalorder %v32, 7
    %v39 = vsel %vm38, %v36, %v37
    %v40 = vsel %vm38, %v37, %v36
    %41 = vrot.lane.b32.xlu0 %v27, 1
    %v42 = vpop.permute.xlu0 %41
    %43 = vrot.lane.b32.xlu0 %v28, 1
    %v44 = vpop.permute.xlu0 %43
    %45 = vrot.lane.b32.xlu0 %v27, 127
    %v46 = vpop.permute.xlu0 %45
    %47 = vrot.lane.b32.xlu0 %v28, 127
    %v48 = vpop.permute.xlu0 %47
    %v49 = vadd.s32 %v32, 8
    %vm50 = vcmp.eq.s32.totalorder %v32, 0
    %vm51 = vcmp.eq.s32.totalorder %v49, 0
    %v52 = vsel %vm50, 0.0, %v35
    %v53 = vsel %vm51, 0.0, %v34
    %vm54 = vcmp.eq.s32.totalorder %v32, 15
    %vm55 = vcmp.eq.s32.totalorder %v49, 15
    %v56 = vsel %vm54, 0.0, %v39
    %v57 = vsel %vm55, 0.0, %v40
    %v58 = vadd.f32 %v52, %v56
    %v59 = vadd.f32 %v53, %v57
    %v60 = vadd.f32 %v58, %v42
    %v61 = vadd.f32 %v59, %v44
    %v62 = vadd.f32 %v60, %v46
    %v63 = vadd.f32 %v61, %v48
    %v64 = vmul.f32 %v27, 4.0
    %v65 = vmul.f32 %v28, 4.0
    %v66 = vsub.f32 %v62, %v64
    %v67 = vsub.f32 %v63, %v65
    %v68 = vand.u32 2147483647, %v66
    %v69 = vand.u32 2147483647, %v67
    %v70 = vstv %s25
    %v71 = vsub.f32 %v68, %v70
    %v72 = vsub.f32 %v69, %v70
    %v73 = vstv %s26
    %v74 = vmul.f32 %v71, %v73
    %v75 = vmul.f32 %v72, %v73
    %vm76 = vcmask 130048
    %77 = vst.msk [vmem:[#allocation5] sm:$0xff] %vm76, %v74
    %78 = vst.msk [vmem:[#allocation5 + $0x8] sm:$0xff] %vm76, %v75
    %s79 = scalar_lea.vmem %s1, 16
    %v80 = vld [vmem:[%s79] sm:$0xff]
    %v81 = vld [vmem:[%s79 + $0x8] sm:$0xff]
    %v82 = vrot.slane %v80, 7
    %v83 = vrot.slane %v81, 7
    %v84 = vsel %vm33, %v82, %v83
    %v85 = vsel %vm33, %v83, %v82
    %v86 = vrot.slane %v80, 1
    %v87 = vrot.slane %v81, 1
    %v88 = vsel %vm38, %v86, %v87
    %v89 = vsel %vm38, %v87, %v86
    %90 = vrot.lane.b32.xlu0 %v80, 1
    %v91 = vpop.permute.xlu0 %90
    %92 = vrot.lane.b32.xlu0 %v81, 1
    %v93 = vpop.permute.xlu0 %92
    %94 = vrot.lane.b32.xlu0 %v80, 127
    %v95 = vpop.permute.xlu0 %94
    %96 = vrot.lane.b32.xlu0 %v81, 127
    %v97 = vpop.permute.xlu0 %96
    %v98 = vsel %vm50, 0.0, %v85
    %v99 = vsel %vm51, 0.0, %v84
    %v100 = vsel %vm54, 0.0, %v88
    %v101 = vsel %vm55, 0.0, %v89
    %v102 = vadd.f32 %v98, %v100
    %v103 = vadd.f32 %v99, %v101
    %v104 = vadd.f32 %v102, %v91
    %v105 = vadd.f32 %v103, %v93
    %v106 = vadd.f32 %v104, %v95
    %v107 = vadd.f32 %v105, %v97
    %v108 = vmul.f32 %v80, 4.0
    %v109 = vmul.f32 %v81, 4.0
    %v110 = vsub.f32 %v106, %v108
    %v111 = vsub.f32 %v107, %v109
    %v112 = vand.u32 2147483647, %v110
    %v113 = vand.u32 2147483647, %v111
    %v114 = vsub.f32 %v112, %v70
    %v115 = vsub.f32 %v113, %v70
    %v116 = vmul.f32 %v114, %v73
    %v117 = vmul.f32 %v115, %v73
    %s118 = scalar_lea.vmem [#allocation5], 16
    %119 = vst.msk [vmem:[%s118] sm:$0xff] %vm76, %v116
    %120 = vst.msk [vmem:[%s118 + $0x8] sm:$0xff] %vm76, %v117
    // Predicated region
    $region14: #{laplacian_layer.3} parent=1 // pred_check
      _
    $region15: #{laplacian_layer.3} parent=1 // pred_check_branch
      %122 = sbr.rel (0) target = $region17
    $region16: #{laplacian_layer.3} parent=1 // pred_region
      %124 = vsyncadd [#allocation3], 0
      %s125 = sshll.u32 [#allocation5], 4
      %s126 = int_to_ptr.vmem [resolvable:$true] %s125
      %s127 = sshll.u32 %s2, 4
      %s128 = int_to_ptr.hbm [resolvable:$true] %s127
      %133 = dma.vmem_to_hbm [thread:$0]  %s126, 512, %s128, [#allocation3], 128, 128, 8
    $region17: #{laplacian_layer.3} parent=1 // pred_fallthru
      _
    // Predicated region
    $region18: #{laplacian_layer.3} parent=1 // pred_check
      _
    $region19: #{laplacian_layer.3} parent=1 // pred_check_branch
      %135 = sbr.rel (0) target = $region21
    $region20: #{laplacian_layer.3} parent=1 // pred_region
      %137 = dma.done [#allocation3], 512
    $region21: #{laplacian_layer.3} parent=1 // pred_fallthru
      _
    %138 = vsyncpa [#allocation3], 1
    %139 = vsyncpa [#allocation4], 1

// kernel: laplacian_layer.2
$region0: #{laplacian_layer.2}
  #allocation0 [shape = 'u32[]', space=smem, size = 0x4, offset = 0x4, fixed_abs, tag = 'smem constant byte address 0x4 - core index']
  #allocation1 [shape = 'u32[72,128]{1,0:T(1,128)}', space=vmem, size = 0x9000, scoped, tag = 'internal scratch']
  %s0 = inlined_call_operand.vmem [shape: f32[2,16,128], index: 0, kind: input, shape index: {}]
  %s1 = inlined_call_operand.vmem [shape: f32[1,8,128], index: 1, kind: output, shape index: {0}]
  %s2 = inlined_call_operand.vmem [shape: f32[1,8,128], index: 2, kind: output, shape index: {1}]
  %3 = xla_tuple %s1, %s2
  %s4 = sld [smem:[#allocation0]]
  $region22: #{laplacian_layer.2} parent=0
    _
  %s6 = ssub.s32 1, %s4
  %s7 = scalar_select 0, %s6, %s4
  // Predicated region
  $region2: #{laplacian_layer.2} parent=0 // pred_check
    _
  $region3: #{laplacian_layer.2} parent=0 // pred_check_branch
    %9 = sbr.rel (0) target = $region5
  $region4: #{laplacian_layer.2} parent=0 // pred_region
    _
  $region5: #{laplacian_layer.2} parent=0 // pred_fallthru
    _
  %v10 = vld [vmem:[%s0] sm:$0xff]
  %v11 = vld [vmem:[%s0 + $0x8] sm:$0xff]
  %v12 = vrot.slane %v10, 7
  %v13 = vrot.slane %v11, 7
  %v14 = vlaneseq
  %v15 = vshrl.u32 %v14, 7
  %vm16 = vcmp.lt.s32.totalorder %v15, 1
  %v17 = vsel %vm16, %v12, %v13
  %v18 = vsel %vm16, %v13, %v12
  %v19 = vrot.slane %v10, 1
  %v20 = vrot.slane %v11, 1
  %vm21 = vcmp.lt.s32.totalorder %v15, 7
  %v22 = vsel %vm21, %v19, %v20
  %v23 = vsel %vm21, %v20, %v19
  %24 = vrot.lane.b32.xlu0 %v10, 1
  %v25 = vpop.permute.xlu0 %24
  %26 = vrot.lane.b32.xlu0 %v11, 1
  %v27 = vpop.permute.xlu0 %26
  %28 = vrot.lane.b32.xlu0 %v10, 127
  %v29 = vpop.permute.xlu0 %28
  %30 = vrot.lane.b32.xlu0 %v11, 127
  %v31 = vpop.permute.xlu0 %30
  %v32 = vadd.s32 %v15, 8
  %vm33 = vcmp.eq.s32.totalorder %v15, 0
  %vm34 = vcmp.eq.s32.totalorder %v32, 0
  %v35 = vsel %vm33, 0.0, %v18
  %v36 = vsel %vm34, 0.0, %v17
  %vm37 = vcmp.eq.s32.totalorder %v15, 15
  %vm38 = vcmp.eq.s32.totalorder %v32, 15
  %v39 = vsel %vm37, 0.0, %v22
  %v40 = vsel %vm38, 0.0, %v23
  %v41 = vadd.f32 %v35, %v39
  %v42 = vadd.f32 %v36, %v40
  %v43 = vadd.f32 %v41, %v25
  %v44 = vadd.f32 %v42, %v27
  %v45 = vadd.f32 %v43, %v29
  %v46 = vadd.f32 %v44, %v31
  %v47 = vmul.f32 %v10, 4.0
  %v48 = vmul.f32 %v11, 4.0
  %v49 = vsub.f32 %v45, %v47
  %v50 = vsub.f32 %v46, %v48
  %v51 = vand.u32 2147483647, %v49
  %v52 = vand.u32 2147483647, %v50
  %s53 = scalar_lea.vmem %s0, 16
  %v54 = vld [vmem:[%s53] sm:$0xff]
  %v55 = vld [vmem:[%s53 + $0x8] sm:$0xff]
  %v56 = vrot.slane %v54, 7
  %v57 = vrot.slane %v55, 7
  %v58 = vsel %vm16, %v56, %v57
  %v59 = vsel %vm16, %v57, %v56
  %v60 = vrot.slane %v54, 1
  %v61 = vrot.slane %v55, 1
  %v62 = vsel %vm21, %v60, %v61
  %v63 = vsel %vm21, %v61, %v60
  %64 = vrot.lane.b32.xlu0 %v54, 1
  %v65 = vpop.permute.xlu0 %64
  %66 = vrot.lane.b32.xlu0 %v55, 1
  %v67 = vpop.permute.xlu0 %66
  %68 = vrot.lane.b32.xlu0 %v54, 127
  %v69 = vpop.permute.xlu0 %68
  %70 = vrot.lane.b32.xlu0 %v55, 127
  %v71 = vpop.permute.xlu0 %70
  %v72 = vsel %vm33, 0.0, %v59
  %v73 = vsel %vm34, 0.0, %v58
  %v74 = vsel %vm37, 0.0, %v62
  %v75 = vsel %vm38, 0.0, %v63
  %v76 = vadd.f32 %v72, %v74
  %v77 = vadd.f32 %v73, %v75
  %v78 = vadd.f32 %v76, %v65
  %v79 = vadd.f32 %v77, %v67
  %v80 = vadd.f32 %v78, %v69
  %v81 = vadd.f32 %v79, %v71
  %v82 = vmul.f32 %v54, 4.0
  %v83 = vmul.f32 %v55, 4.0
  %v84 = vsub.f32 %v80, %v82
  %v85 = vsub.f32 %v81, %v83
  %v86 = vand.u32 2147483647, %v84
  %v87 = vand.u32 2147483647, %v85
  %v88 = vmin.f32 %v51, %v86
  %v89 = vmin.f32 %v52, %v87
  %v90 = vmax.f32 %v51, %v86
  %v91 = vmax.f32 %v52, %v87
  %v92 = vlaneseq
  %v93 = vand.u32 %v92, 127
  %vm94 = vcmp.lt.s32.totalorder %v15, 16
  %vm95 = vcmp.lt.s32.totalorder %v32, 16
  %vm96 = vcmp.lt.s32.totalorder %v93, 16
  %vm97 = vmand %vm94, %vm96
  %vm98 = vmand %vm95, %vm96
  %v99 = vsel %vm97, %v88, inf
  %v100 = vsel %vm98, %v89, inf
  %v101 = vsel %vm97, %v90, -inf
  %v102 = vsel %vm98, %v91, -inf
  %v103 = vmin.f32 %v99, %v100
  %104 = vmin.xlane.f32.xlu0 %v103
  %v105 = vpop.xlane.xlu0 %104
  %v106 = vrot.slane %v105, 4
  %v107 = vmin.f32 %v105, %v106
  %v108 = vrot.slane %v107, 2
  %v109 = vmin.f32 %v107, %v108
  %v110 = vrot.slane %v109, 1
  %v111 = vmin.f32 %v109, %v110
  %s112 = vtos %v111
  %v113 = vstv %s112
  %114 = vst [vmem:[%s1] sm:$0xff] %v113
  %v115 = vmax.f32 %v101, %v102
  %116 = vmax.xlane.f32.xlu0 %v115
  %v117 = vpop.xlane.xlu0 %116
  %v118 = vrot.slane %v117, 4
  %v119 = vmax.f32 %v117, %v118
  %v120 = vrot.slane %v119, 2
  %v121 = vmax.f32 %v119, %v120
  %v122 = vrot.slane %v121, 1
  %v123 = vmax.f32 %v121, %v122
  %s124 = vtos %v123
  %v125 = vstv %s124
  %126 = vst [vmem:[%s2] sm:$0xff] %v125
  // Predicated region
  $region6: #{laplacian_layer.2} parent=0 // pred_check
    _
  $region7: #{laplacian_layer.2} parent=0 // pred_check_branch
    %128 = sbr.rel (0) target = $region9
  $region8: #{laplacian_layer.2} parent=0 // pred_region
    _
  $region9: #{laplacian_layer.2} parent=0 // pred_fallthru
    _
  // Predicated region
  $region10: #{laplacian_layer.2} parent=0 // pred_check
    _
  $region11: #{laplacian_layer.2} parent=0 // pred_check_branch
    %130 = sbr.rel (0) target = $region13
  $region12: #{laplacian_layer.2} parent=0 // pred_region
    _
  $region13: #{laplacian_layer.2} parent=0 // pred_fallthru
    _
  // Predicated region
  $region14: #{laplacian_layer.2} parent=0 // pred_check
    _
  $region15: #{laplacian_layer.2} parent=0 // pred_check_branch
    %132 = sbr.rel (0) target = $region17
  $region16: #{laplacian_layer.2} parent=0 // pred_region
    _
  $region17: #{laplacian_layer.2} parent=0 // pred_fallthru
    _
  // Predicated region
  $region18: #{laplacian_layer.2} parent=0 // pred_check
    _
  $region19: #{laplacian_layer.2} parent=0 // pred_check_branch
    %134 = sbr.rel (0) target = $region21
  $region20: #{laplacian_layer.2} parent=0 // pred_region
    _
  $region21: #{laplacian_layer.2} parent=0 // pred_fallthru
    _

</llo_original>
